<compile_context>
chip_gen: v7x
topology: tpu7x:2x2x1
jax: 0.10.0
libtpu: 0.0.40
codegen_flags: <defaults>
</compile_context>

<pallas_src>
import jax
import jax.numpy as jnp
from jax.experimental import pallas as pl
from jax.experimental.pallas import tpu as pltpu

_LANES = 128


def _elementwise_kernel(x_ref, add_ref, mul_ref, sub_ref, div_ref, gt_ref, lt_ref):
    x = x_ref[...]
    add_ref[...] = x + 2.0
    mul_ref[...] = x * 3.0
    sub_ref[...] = x - 1.0
    div_ref[...] = x * 0.25          # x / 4 (exact)
    gt_ref[...] = x > 1.0            # stored as bool -> 1 B/elem write traffic
    lt_ref[...] = x < 5.0


def pt_module_forward(x, *, tile_rows=1024):
    """Pallas implementation of PtModule.forward.

    x: float array of any shape (e.g. NCHW). Returns a dict matching the
    PyTorch module's outputs (bool dtype for the comparison entries).
    """
    orig_shape = x.shape
    dtype = x.dtype
    n = x.size

    # Flatten to a lane-dense (rows, 128) slab, rows a multiple of 8.
    # The pad copy is only materialized when actually required.
    rows = pl.cdiv(n, _LANES)
    rows_padded = pl.cdiv(rows, 8) * 8
    pad = rows_padded * _LANES - n
    x_flat = x.reshape(-1)
    if pad:
        x_flat = jnp.pad(x_flat, (0, pad))
    x2d = x_flat.reshape(rows_padded, _LANES)

    # Row tiling: single full-array block for small inputs, otherwise
    # tile_rows(=1024, multiple of 32 so bool blocks are tiling-aligned) rows
    # per grid step.  Double-buffered VMEM footprint at tile_rows=1024 is
    # ~5.5 MiB (f32 + 2 bool outputs) -- well under the scoped limit on
    # v5e (16 MiB), v6e (32 MiB) and v7x (32 MiB).
    block_rows = rows_padded if rows_padded <= tile_rows else tile_rows
    grid = (pl.cdiv(rows_padded, block_rows),)   # ragged last block handled by Pallas

    block_spec = pl.BlockSpec((block_rows, _LANES), lambda i: (i, 0))
    val_shape = jax.ShapeDtypeStruct((rows_padded, _LANES), dtype)
    cmp_shape = jax.ShapeDtypeStruct((rows_padded, _LANES), jnp.bool_)

    outs = pl.pallas_call(
        _elementwise_kernel,
        out_shape=(val_shape, val_shape, val_shape, val_shape, cmp_shape, cmp_shape),
        grid=grid,
        in_specs=[block_spec],
        out_specs=(block_spec,) * 6,
        compiler_params=pltpu.CompilerParams(
            dimension_semantics=("parallel",),   # shard row-grid across TCs (v7x megacore)
        ),
    )(x2d)

    def unflatten(a):
        a = a.reshape(-1)
        if pad:
            a = a[:n]
        return a.reshape(orig_shape)

    add_o, mul_o, sub_o, div_o, gt_o, lt_o = outs
    return {
        "addition": unflatten(add_o),
        "multiplication": unflatten(mul_o),
        "subtraction": unflatten(sub_o),
        "division": unflatten(div_o),
        "greater_than": unflatten(gt_o),
        "less_than": unflatten(lt_o),
    }


def _reference(x):
    return {
        "addition": x + 2,
        "multiplication": x * 3,
        "subtraction": x - 1,
        "division": x / 4,
        "greater_than": x > 1,
        "less_than": x < 5,
    }


def _check(x):
    out = pt_module_forward(x)
    jax.block_until_ready(out)
    ref = _reference(x)
    for k in ref:
        assert out[k].shape == ref[k].shape, k
        assert out[k].dtype == ref[k].dtype, k
        if out[k].dtype == jnp.bool_:
            assert bool(jnp.all(out[k] == ref[k])), k
        else:
            assert bool(jnp.allclose(out[k], ref[k], atol=1e-6)), k


if __name__ == "__main__":
    key = jax.random.PRNGKey(0)

    # Primary small NCHW input (single-block path).
    x_small = jax.random.normal(key, (2, 4, 16, 16), dtype=jnp.float32) * 4.0
    _check(x_small)

    # Slightly larger input that exercises the multi-block pipelined grid path
    # (flattened size is a multiple of tile_rows * 128, so the grid is exact).
    x_big = jax.random.normal(key, (2, 8, 128, 128), dtype=jnp.float32) * 4.0
    _check(x_big)

    print("KERNEL_OK")
</pallas_src>

<mosaic_0001>
module attributes {stable_mosaic.version = 11 : i64} {
  func.func @_elementwise_kernel(%arg0: i32, %arg1: memref<16x128xf32, #tpu.memory_space<vmem>>, %arg2: memref<16x128xf32, #tpu.memory_space<vmem>>, %arg3: memref<16x128xf32, #tpu.memory_space<vmem>>, %arg4: memref<16x128xf32, #tpu.memory_space<vmem>>, %arg5: memref<16x128xf32, #tpu.memory_space<vmem>>, %arg6: memref<16x128xi32, #tpu.memory_space<vmem>>, %arg7: memref<16x128xi32, #tpu.memory_space<vmem>>) attributes {dimension_semantics = [#tpu.dimension_semantics<parallel>], iteration_bounds = array<i64: 1>, scalar_prefetch = 0 : i64, scratch_operands = 0 : i64, tpu.core_type = #tpu.core_type<tc>, window_params = [{transform_indices = @transform_0, window_bounds = array<i64: 16, 128>}, {transform_indices = @transform_1, window_bounds = array<i64: 16, 128>}, {transform_indices = @transform_2, window_bounds = array<i64: 16, 128>}, {transform_indices = @transform_3, window_bounds = array<i64: 16, 128>}, {transform_indices = @transform_4, window_bounds = array<i64: 16, 128>}, {transform_indices = @transform_5, window_bounds = array<i64: 16, 128>}, {transform_indices = @transform_6, window_bounds = array<i64: 16, 128>}]} {
    %c0 = arith.constant 0 : index
    %c0_0 = arith.constant 0 : index
    %0 = vector.load %arg1[%c0, %c0_0] : memref<16x128xf32, #tpu.memory_space<vmem>>, vector<16x128xf32>
    %cst = arith.constant 2.000000e+00 : f32
    %1 = vector.broadcast %cst : f32 to vector<16x128xf32>
    %2 = arith.addf %0, %1 : vector<16x128xf32>
    %c0_1 = arith.constant 0 : index
    %c0_2 = arith.constant 0 : index
    %3 = vector.load %arg2[%c0_1, %c0_2] : memref<16x128xf32, #tpu.memory_space<vmem>>, vector<16x128xf32>
    tpu.vector_store %arg2[%c0_1, %c0_2], %2 {strides = array<i32>} : memref<16x128xf32, #tpu.memory_space<vmem>>, vector<16x128xf32>,
    %cst_3 = arith.constant 3.000000e+00 : f32
    %4 = vector.broadcast %cst_3 : f32 to vector<16x128xf32>
    %5 = arith.mulf %0, %4 : vector<16x128xf32>
    %c0_4 = arith.constant 0 : index
    %c0_5 = arith.constant 0 : index
    %6 = vector.load %arg3[%c0_4, %c0_5] : memref<16x128xf32, #tpu.memory_space<vmem>>, vector<16x128xf32>
    tpu.vector_store %arg3[%c0_4, %c0_5], %5 {strides = array<i32>} : memref<16x128xf32, #tpu.memory_space<vmem>>, vector<16x128xf32>,
    %cst_6 = arith.constant 1.000000e+00 : f32
    %7 = vector.broadcast %cst_6 : f32 to vector<16x128xf32>
    %8 = arith.subf %0, %7 : vector<16x128xf32>
    %c0_7 = arith.constant 0 : index
    %c0_8 = arith.constant 0 : index
    %9 = vector.load %arg4[%c0_7, %c0_8] : memref<16x128xf32, #tpu.memory_space<vmem>>, vector<16x128xf32>
    tpu.vector_store %arg4[%c0_7, %c0_8], %8 {strides = array<i32>} : memref<16x128xf32, #tpu.memory_space<vmem>>, vector<16x128xf32>,
    %cst_9 = arith.constant 2.500000e-01 : f32
    %10 = vector.broadcast %cst_9 : f32 to vector<16x128xf32>
    %11 = arith.mulf %0, %10 : vector<16x128xf32>
    %c0_10 = arith.constant 0 : index
    %c0_11 = arith.constant 0 : index
    %12 = vector.load %arg5[%c0_10, %c0_11] : memref<16x128xf32, #tpu.memory_space<vmem>>, vector<16x128xf32>
    tpu.vector_store %arg5[%c0_10, %c0_11], %11 {strides = array<i32>} : memref<16x128xf32, #tpu.memory_space<vmem>>, vector<16x128xf32>,
    %cst_12 = arith.constant 1.000000e+00 : f32
    %13 = vector.broadcast %cst_12 : f32 to vector<16x128xf32>
    %14 = arith.cmpf ogt, %0, %13 : vector<16x128xf32>
    %c0_13 = arith.constant 0 : index
    %c0_14 = arith.constant 0 : index
    %15 = vector.load %arg6[%c0_13, %c0_14] : memref<16x128xi32, #tpu.memory_space<vmem>>, vector<16x128xi32>
    %16 = arith.extui %14 : vector<16x128xi1> to vector<16x128xi32>
    %cst_15 = arith.constant dense<0> : vector<16x128xi32>
    %17 = arith.cmpi ne, %15, %cst_15 : vector<16x128xi32>
    tpu.vector_store %arg6[%c0_13, %c0_14], %16 {strides = array<i32>} : memref<16x128xi32, #tpu.memory_space<vmem>>, vector<16x128xi32>,
    %cst_16 = arith.constant 5.000000e+00 : f32
    %18 = vector.broadcast %cst_16 : f32 to vector<16x128xf32>
    %19 = arith.cmpf olt, %0, %18 : vector<16x128xf32>
    %c0_17 = arith.constant 0 : index
    %c0_18 = arith.constant 0 : index
    %20 = vector.load %arg7[%c0_17, %c0_18] : memref<16x128xi32, #tpu.memory_space<vmem>>, vector<16x128xi32>
    %21 = arith.extui %19 : vector<16x128xi1> to vector<16x128xi32>
    %cst_19 = arith.constant dense<0> : vector<16x128xi32>
    %22 = arith.cmpi ne, %20, %cst_19 : vector<16x128xi32>
    tpu.vector_store %arg7[%c0_17, %c0_18], %21 {strides = array<i32>} : memref<16x128xi32, #tpu.memory_space<vmem>>, vector<16x128xi32>,
    return
  }
  func.func @transform_0(%arg0: i32) -> (i32, i32) {
    %c0_i32 = arith.constant 0 : i32
    %c0_i32_0 = arith.constant 0 : i32
    return %arg0, %c0_i32 : i32, i32
  }
  func.func @transform_1(%arg0: i32) -> (i32, i32) {
    %c0_i32 = arith.constant 0 : i32
    %c0_i32_0 = arith.constant 0 : i32
    return %arg0, %c0_i32 : i32, i32
  }
  func.func @transform_2(%arg0: i32) -> (i32, i32) {
    %c0_i32 = arith.constant 0 : i32
    %c0_i32_0 = arith.constant 0 : i32
    return %arg0, %c0_i32 : i32, i32
  }
  func.func @transform_3(%arg0: i32) -> (i32, i32) {
    %c0_i32 = arith.constant 0 : i32
    %c0_i32_0 = arith.constant 0 : i32
    return %arg0, %c0_i32 : i32, i32
  }
  func.func @transform_4(%arg0: i32) -> (i32, i32) {
    %c0_i32 = arith.constant 0 : i32
    %c0_i32_0 = arith.constant 0 : i32
    return %arg0, %c0_i32 : i32, i32
  }
  func.func @transform_5(%arg0: i32) -> (i32, i32) {
    %c0_i32 = arith.constant 0 : i32
    %c0_i32_0 = arith.constant 0 : i32
    return %arg0, %c0_i32 : i32, i32
  }
  func.func @transform_6(%arg0: i32) -> (i32, i32) {
    %c0_i32 = arith.constant 0 : i32
    %c0_i32_0 = arith.constant 0 : i32
    return %arg0, %c0_i32 : i32, i32
  }
}

</mosaic_0001>

<llo_original>
// kernel: tpu_custom_call.1
$region0: #{tpu_custom_call.1}
  #allocation0 [shape = 'u32[]', space=smem, size = 0x4, offset = 0x4, fixed_abs, tag = 'smem constant byte address 0x4 - core index']
  #allocation1 [shape = 'u32[144,128]{1,0:T(1,128)}', space=vmem, size = 0x12000, scoped, tag = 'internal scratch']
  %s0 = inlined_call_operand.hbm [shape: f32[16,128], index: 0, kind: input, shape index: {}]
  %s1 = inlined_call_operand.hbm [shape: f32[16,128], index: 1, kind: output, shape index: {0}]
  %s2 = inlined_call_operand.hbm [shape: f32[16,128], index: 2, kind: output, shape index: {1}]
  %s3 = inlined_call_operand.hbm [shape: f32[16,128], index: 3, kind: output, shape index: {2}]
  %s4 = inlined_call_operand.hbm [shape: f32[16,128], index: 4, kind: output, shape index: {3}]
  %s5 = inlined_call_operand.vmem [shape: s32[16,128], index: 5, kind: output, shape index: {4}]
  %s6 = inlined_call_operand.vmem [shape: s32[16,128], index: 6, kind: output, shape index: {5}]
  %7 = xla_tuple %s1, %s2, %s3, %s4, %s5, %s6
  %s8 = sld [smem:[#allocation0]]
  $region58: #{tpu_custom_call.1} parent=0
    _
  %s10 = ssub.s32 1, %s8
  %s11 = scalar_select 0, %s10, %s8
  $region1: #{tpu_custom_call.1} parent=0
    #allocation2 [shape = 'u8[8192]{0}', space=vmem, size = 0x2000, scoped, tag = 'input window, operand 0, single buffered']
    #allocation3 [shape = 's32[1]{0}', space=sflag, size = 0x4, scoped, tag = 'scoped memory for tpu_custom_call.1']
    #allocation4 [shape = 's32[1]{0}', space=sflag, size = 0x4, scoped, tag = 'scoped memory for tpu_custom_call.1']
    #allocation5 [shape = 'u8[8192]{0}', space=vmem, size = 0x2000, scoped, tag = 'output window, operand 0, single buffered']
    #allocation6 [shape = 'u8[8192]{0}', space=vmem, size = 0x2000, scoped, tag = 'output window, operand 1, single buffered']
    #allocation7 [shape = 's32[1]{0}', space=sflag, size = 0x4, scoped, tag = 'scoped memory for tpu_custom_call.1']
    #allocation8 [shape = 'u8[8192]{0}', space=vmem, size = 0x2000, scoped, tag = 'output window, operand 2, single buffered']
    #allocation9 [shape = 'u8[8192]{0}', space=vmem, size = 0x2000, scoped, tag = 'output window, operand 3, single buffered']
    #allocation10 [shape = 's32[1]{0}', space=sflag, size = 0x4, scoped, tag = 'scoped memory for tpu_custom_call.1']
    %12 = vsyncpa [#allocation3], 0
    %13 = vsyncpa [#allocation4], 0
    %14 = vsyncpa [#allocation7], 0
    %15 = vsyncpa [#allocation10], 0
    // Predicated region
    $region2: #{tpu_custom_call.1} parent=1 // pred_check
      _
    $region3: #{tpu_custom_call.1} parent=1 // pred_check_branch
      %17 = sbr.rel (0) target = $region5
    $region4: #{tpu_custom_call.1} parent=1 // pred_region
      %s19 = ssub.s32 256, 256
      %20 = vsyncadd [#allocation3], %s19
      %s21 = sshll.u32 [#allocation2], 4
      %s22 = int_to_ptr.vmem [resolvable:$true] %s21
      %27 = dma.hbm_to_vmem [thread:$0]  %s0, 256, %s22, [#allocation3], 128, 128, 8
    $region5: #{tpu_custom_call.1} parent=1 // pred_fallthru
      _
    // Predicated region
    $region6: #{tpu_custom_call.1} parent=1 // pred_check
      _
    $region7: #{tpu_custom_call.1} parent=1 // pred_check_branch
      %29 = sbr.rel (0) target = $region9
    $region8: #{tpu_custom_call.1} parent=1 // pred_region
      %30 = dma.done [#allocation3], 256
    $region9: #{tpu_custom_call.1} parent=1 // pred_fallthru
      _
    %v31 = vld [vmem:[#allocation2] sm:$0xff]
    %v32 = vld [vmem:[#allocation2 + $0x8] sm:$0xff]
    %v33 = vadd.f32 %v31, 2.0
    %v34 = vadd.f32 %v32, 2.0
    %35 = vst [vmem:[#allocation5] sm:$0xff] %v33
    %36 = vst [vmem:[#allocation5 + $0x8] sm:$0xff] %v34
    %v37 = vmul.f32 %v31, 3.0
    %v38 = vmul.f32 %v32, 3.0
    %39 = vst [vmem:[#allocation6] sm:$0xff] %v37
    %40 = vst [vmem:[#allocation6 + $0x8] sm:$0xff] %v38
    %v41 = vsub.f32 %v31, 1.0
    %v42 = vsub.f32 %v32, 1.0
    %43 = vst [vmem:[#allocation8] sm:$0xff] %v41
    %44 = vst [vmem:[#allocation8 + $0x8] sm:$0xff] %v42
    %v45 = vmul.f32 %v31, 0.25
    %v46 = vmul.f32 %v32, 0.25
    %47 = vst [vmem:[#allocation9] sm:$0xff] %v45
    %48 = vst [vmem:[#allocation9 + $0x8] sm:$0xff] %v46
    %vm49 = vcmp.gt.f32.partialorder %v31, 1.0
    %vm50 = vcmp.gt.f32.partialorder %v32, 1.0
    %v51 = vsel %vm49, 1, 0
    %v52 = vsel %vm50, 1, 0
    %53 = vst [vmem:[%s5] sm:$0xff] %v51
    %54 = vst [vmem:[%s5 + $0x8] sm:$0xff] %v52
    %vm55 = vcmp.lt.f32.partialorder %v31, 5.0
    %vm56 = vcmp.lt.f32.partialorder %v32, 5.0
    %v57 = vsel %vm55, 1, 0
    %v58 = vsel %vm56, 1, 0
    %59 = vst [vmem:[%s6] sm:$0xff] %v57
    %60 = vst [vmem:[%s6 + $0x8] sm:$0xff] %v58
    // Predicated region
    $region10: #{tpu_custom_call.1} parent=1 // pred_check
      _
    $region11: #{tpu_custom_call.1} parent=1 // pred_check_branch
      %62 = sbr.rel (0) target = $region13
    $region12: #{tpu_custom_call.1} parent=1 // pred_region
      %s64 = ssub.s32 256, 256
      %65 = vsyncadd [#allocation4], %s64
      %s66 = sshll.u32 [#allocation5], 4
      %s67 = int_to_ptr.vmem [resolvable:$true] %s66
      %72 = dma.vmem_to_hbm [thread:$0]  %s67, 256, %s1, [#allocation4], 128, 128, 8
    $region13: #{tpu_custom_call.1} parent=1 // pred_fallthru
      _
    // Predicated region
    $region14: #{tpu_custom_call.1} parent=1 // pred_check
      _
    $region15: #{tpu_custom_call.1} parent=1 // pred_check_branch
      %74 = sbr.rel (0) target = $region17
    $region16: #{tpu_custom_call.1} parent=1 // pred_region
      %s76 = ssub.s32 256, 256
      %77 = vsyncadd [#allocation7], %s76
      %s78 = sshll.u32 [#allocation6], 4
      %s79 = int_to_ptr.vmem [resolvable:$true] %s78
      %84 = dma.vmem_to_hbm [thread:$0]  %s79, 256, %s2, [#allocation7], 128, 128, 8
    $region17: #{tpu_custom_call.1} parent=1 // pred_fallthru
      _
    // Predicated region
    $region18: #{tpu_custom_call.1} parent=1 // pred_check
      _
    $region19: #{tpu_custom_call.1} parent=1 // pred_check_branch
      %86 = sbr.rel (0) target = $region21
    $region20: #{tpu_custom_call.1} parent=1 // pred_region
      %s88 = ssub.s32 256, 256
      %89 = vsyncadd [#allocation7], %s88
      %s90 = sshll.u32 [#allocation8], 4
      %s91 = int_to_ptr.vmem [resolvable:$true] %s90
      %96 = dma.vmem_to_hbm [thread:$0]  %s91, 256, %s3, [#allocation7], 128, 128, 8
    $region21: #{tpu_custom_call.1} parent=1 // pred_fallthru
      _
    // Predicated region
    $region22: #{tpu_custom_call.1} parent=1 // pred_check
      _
    $region23: #{tpu_custom_call.1} parent=1 // pred_check_branch
      %98 = sbr.rel (0) target = $region25
    $region24: #{tpu_custom_call.1} parent=1 // pred_region
      %s100 = ssub.s32 256, 256
      %101 = vsyncadd [#allocation10], %s100
      %s102 = sshll.u32 [#allocation9], 4
      %s103 = int_to_ptr.vmem [resolvable:$true] %s102
      %108 = dma.vmem_to_hbm [thread:$0]  %s103, 256, %s4, [#allocation10], 128, 128, 8
    $region25: #{tpu_custom_call.1} parent=1 // pred_fallthru
      _
    // Predicated region
    $region26: #{tpu_custom_call.1} parent=1 // pred_check
      _
    $region27: #{tpu_custom_call.1} parent=1 // pred_check_branch
      %110 = sbr.rel (0) target = $region29
    $region28: #{tpu_custom_call.1} parent=1 // pred_region
      _
    $region29: #{tpu_custom_call.1} parent=1 // pred_fallthru
      _
    // Predicated region
    $region30: #{tpu_custom_call.1} parent=1 // pred_check
      _
    $region31: #{tpu_custom_call.1} parent=1 // pred_check_branch
      %112 = sbr.rel (0) target = $region33
    $region32: #{tpu_custom_call.1} parent=1 // pred_region
      _
    $region33: #{tpu_custom_call.1} parent=1 // pred_fallthru
      _
    // Predicated region
    $region34: #{tpu_custom_call.1} parent=1 // pred_check
      _
    $region35: #{tpu_custom_call.1} parent=1 // pred_check_branch
      %114 = sbr.rel (0) target = $region37
    $region36: #{tpu_custom_call.1} parent=1 // pred_region
      %115 = dma.done [#allocation4], 256
    $region37: #{tpu_custom_call.1} parent=1 // pred_fallthru
      _
    // Predicated region
    $region38: #{tpu_custom_call.1} parent=1 // pred_check
      _
    $region39: #{tpu_custom_call.1} parent=1 // pred_check_branch
      %117 = sbr.rel (0) target = $region41
    $region40: #{tpu_custom_call.1} parent=1 // pred_region
      %118 = dma.done [#allocation7], 256
    $region41: #{tpu_custom_call.1} parent=1 // pred_fallthru
      _
    // Predicated region
    $region42: #{tpu_custom_call.1} parent=1 // pred_check
      _
    $region43: #{tpu_custom_call.1} parent=1 // pred_check_branch
      %120 = sbr.rel (0) target = $region45
    $region44: #{tpu_custom_call.1} parent=1 // pred_region
      %121 = dma.done [#allocation7], 256
    $region45: #{tpu_custom_call.1} parent=1 // pred_fallthru
      _
    // Predicated region
    $region46: #{tpu_custom_call.1} parent=1 // pred_check
      _
    $region47: #{tpu_custom_call.1} parent=1 // pred_check_branch
      %123 = sbr.rel (0) target = $region49
    $region48: #{tpu_custom_call.1} parent=1 // pred_region
      %124 = dma.done [#allocation10], 256
    $region49: #{tpu_custom_call.1} parent=1 // pred_fallthru
      _
    // Predicated region
    $region50: #{tpu_custom_call.1} parent=1 // pred_check
      _
    $region51: #{tpu_custom_call.1} parent=1 // pred_check_branch
      %126 = sbr.rel (0) target = $region53
    $region52: #{tpu_custom_call.1} parent=1 // pred_region
      _
    $region53: #{tpu_custom_call.1} parent=1 // pred_fallthru
      _
    // Predicated region
    $region54: #{tpu_custom_call.1} parent=1 // pred_check
      _
    $region55: #{tpu_custom_call.1} parent=1 // pred_check_branch
      %128 = sbr.rel (0) target = $region57
    $region56: #{tpu_custom_call.1} parent=1 // pred_region
      _
    $region57: #{tpu_custom_call.1} parent=1 // pred_fallthru
      _
    %129 = vsyncpa [#allocation3], 1
    %130 = vsyncpa [#allocation4], 1
    %131 = vsyncpa [#allocation7], 1
    %132 = vsyncpa [#allocation10], 1

</llo_original>
